<compile_context>
chip_gen: v6e
topology: v6e:2x2x1
jax: 0.10.0
libtpu: 0.0.40
codegen_flags: <defaults>
</compile_context>

<pallas_src>
import jax
import jax.numpy as jnp
from jax.experimental import pallas as pl
from jax.experimental.pallas import tpu as pltpu

_HIDDEN = 32


def _round_up(x, m):
    return ((x + m - 1) // m) * m


# --------------------------------------------------------------------------
# Kernel: one batch tile, fully fused (both matmuls, biases, tanh).
# --------------------------------------------------------------------------
def _obs_encoder_kernel(x_ref, w1_ref, b1_ref, w2_ref, b2_ref, out_ref):
    """x_ref : [B_blk, Kpad]   lane-dense concatenated observations (zero-padded)
       w1_ref: [Kpad, Hpad]    block-diagonal packed per-encoder weights
       b1_ref: [1, Hpad]       concatenated per-encoder biases (zero-padded)
       w2_ref: [Hpad, 32]      final weight, transposed + zero row padding
       b2_ref: [1, 32]
       out   : [B_blk, 32]
    """
    enc = jnp.tanh(
        jnp.dot(x_ref[...], w1_ref[...], preferred_element_type=jnp.float32)
        + b1_ref[...])
    out = (jnp.dot(enc.astype(w2_ref.dtype), w2_ref[...],
                   preferred_element_type=jnp.float32)
           + b2_ref[...])
    out_ref[...] = jnp.tanh(out).astype(out_ref.dtype)


# --------------------------------------------------------------------------
# One-time parameter packing (hoisted out of the forward hot path).
# --------------------------------------------------------------------------
def prepare_params(params, compute_dtype=jnp.float32):
    """Pack PyTorch-layout params into block-diagonal / lane-dense form."""
    w1_list, b1_list = params["w1"], params["b1"]
    n = len(w1_list)
    dims = [int(w.shape[1]) for w in w1_list]
    sum_d = sum(dims)
    kpad = max(128, _round_up(sum_d, 128))        # contracted dim, MXU-aligned
    hpad = max(128, _round_up(n * _HIDDEN, 128))  # hidden concat dim, lane-dense

    w1_bd = jnp.zeros((kpad, hpad), jnp.float32)
    b1_cat = jnp.zeros((1, hpad), jnp.float32)
    off = 0
    for i, (w, b) in enumerate(zip(w1_list, b1_list)):
        d = dims[i]
        w1_bd = w1_bd.at[off:off + d, i * _HIDDEN:(i + 1) * _HIDDEN].set(
            w.T.astype(jnp.float32))
        b1_cat = b1_cat.at[0, i * _HIDDEN:(i + 1) * _HIDDEN].set(
            b.astype(jnp.float32))
        off += d

    w2_t = jnp.zeros((hpad, _HIDDEN), jnp.float32)
    w2_t = w2_t.at[:n * _HIDDEN, :].set(params["w2"].T.astype(jnp.float32))
    b2 = params["b2"].astype(jnp.float32)[None, :]

    return {
        "w1_bd": w1_bd.astype(compute_dtype),
        "b1": b1_cat.astype(compute_dtype),
        "w2_t": w2_t.astype(compute_dtype),
        "b2": b2.astype(compute_dtype),
        "dims": tuple(dims),
        "kpad": kpad,
        "hpad": hpad,
        "compute_dtype": compute_dtype,
    }


# --------------------------------------------------------------------------
# Forward pass (single fused pallas_call, batch-tiled grid).
# --------------------------------------------------------------------------
def observation_encoder_pallas(observations, packed, *, batch_block=1024):
    squeeze = observations[0].ndim == 1
    if squeeze:  # unbatched branch of the PyTorch forward: same math with B=1
        observations = [o[None, :] for o in observations]

    kpad = packed["kpad"]
    hpad = packed["hpad"]
    cdt = packed["compute_dtype"]
    itemsize = jnp.dtype(cdt).itemsize
    B = observations[0].shape[0]

    # Lane-dense concat on the feature axis, then pad lanes to kpad and pad
    # the batch up to a multiple of the tile (tile itself is a multiple of 8).
    x_cat = jnp.concatenate([o.astype(cdt) for o in observations], axis=-1)
    sum_d = x_cat.shape[-1]
    b_blk = min(batch_block, _round_up(B, 8))
    bp = _round_up(B, b_blk)
    x_pad = jnp.pad(x_cat, ((0, bp - B), (0, kpad - sum_d)))

    grid = (bp // b_blk,)
    cost = pl.CostEstimate(
        flops=2 * bp * (kpad * hpad + hpad * _HIDDEN),
        transcendentals=bp * (hpad + _HIDDEN),
        bytes_accessed=(bp * kpad * itemsize
                        + (kpad * hpad + hpad + hpad * _HIDDEN + _HIDDEN) * itemsize
                        + bp * _HIDDEN * 4),
    )

    out = pl.pallas_call(
        _obs_encoder_kernel,
        out_shape=jax.ShapeDtypeStruct((bp, _HIDDEN), jnp.float32),
        grid=grid,
        in_specs=[
            pl.BlockSpec((b_blk, kpad), lambda i: (i, 0)),   # streamed batch tile
            pl.BlockSpec((kpad, hpad), lambda i: (0, 0)),    # weights stay resident
            pl.BlockSpec((1, hpad), lambda i: (0, 0)),
            pl.BlockSpec((hpad, _HIDDEN), lambda i: (0, 0)),
            pl.BlockSpec((1, _HIDDEN), lambda i: (0, 0)),
        ],
        out_specs=pl.BlockSpec((b_blk, _HIDDEN), lambda i: (i, 0)),
        compiler_params=pltpu.CompilerParams(
            dimension_semantics=("parallel",)),  # lets v7x shard batch over 2 TCs
        cost_estimate=cost,
    )(x_pad, packed["w1_bd"], packed["b1"], packed["w2_t"], packed["b2"])

    out = out[:B]
    return out[0] if squeeze else out


# --------------------------------------------------------------------------
# Init + pure-JAX reference (PyTorch Linear layout / semantics).
# --------------------------------------------------------------------------
def init_params(key, obs_dims):
    """Deterministic init mirroring nn.Linear default (uniform +-1/sqrt(fan_in))."""
    params = {"w1": [], "b1": []}
    for d in obs_dims:
        key, k1, k2 = jax.random.split(key, 3)
        bound = 1.0 / (d ** 0.5)
        params["w1"].append(
            jax.random.uniform(k1, (32, d), jnp.float32, -bound, bound))
        params["b1"].append(
            jax.random.uniform(k2, (32,), jnp.float32, -bound, bound))
    fan_in = len(obs_dims) * 32
    bound = 1.0 / (fan_in ** 0.5)
    key, k1, k2 = jax.random.split(key, 3)
    params["w2"] = jax.random.uniform(k1, (32, fan_in), jnp.float32, -bound, bound)
    params["b2"] = jax.random.uniform(k2, (32,), jnp.float32, -bound, bound)
    return params


def observation_encoder_ref(observations, params):
    enc = []
    for obs, w, b in zip(observations, params["w1"], params["b1"]):
        enc.append(jnp.tanh(obs @ w.T + b))
    enc = jnp.concatenate(enc, axis=-1)
    return jnp.tanh(enc @ params["w2"].T + params["b2"])


if __name__ == "__main__":
    key = jax.random.PRNGKey(0)
    obs_dims = [4, 6, 8]
    batch = 2

    key, pkey = jax.random.split(key)
    params = init_params(pkey, obs_dims)
    packed = prepare_params(params)  # packed once, reused every forward

    observations = []
    for d in obs_dims:
        key, k = jax.random.split(key)
        observations.append(jax.random.normal(k, (batch, d), jnp.float32))

    # Batched path.
    out = observation_encoder_pallas(observations, packed)
    out = jax.block_until_ready(out)
    ref = observation_encoder_ref(observations, params)
    assert out.shape == (batch, 32), out.shape
    assert jnp.allclose(out, ref, atol=1e-5, rtol=1e-5), "batched mismatch vs reference"

    # Unbatched (1-D observation) path.
    obs_1d = [o[0] for o in observations]
    out_1d = jax.block_until_ready(observation_encoder_pallas(obs_1d, packed))
    ref_1d = observation_encoder_ref(
        [o[None, :] for o in obs_1d], params)[0]
    assert out_1d.shape == (32,), out_1d.shape
    assert jnp.allclose(out_1d, ref_1d, atol=1e-5, rtol=1e-5), "1-D mismatch vs reference"

    print("KERNEL_OK")
</pallas_src>

<mosaic_0001>
module attributes {stable_mosaic.version = 11 : i64} {
  func.func @_obs_encoder_kernel(%arg0: i32, %arg1: memref<8x128xf32, #tpu.memory_space<vmem>>, %arg2: memref<128x128xf32, #tpu.memory_space<vmem>>, %arg3: memref<1x128xf32, #tpu.memory_space<vmem>>, %arg4: memref<128x32xf32, #tpu.memory_space<vmem>>, %arg5: memref<1x32xf32, #tpu.memory_space<vmem>>, %arg6: memref<8x32xf32, #tpu.memory_space<vmem>>) attributes {dimension_semantics = [#tpu.dimension_semantics<parallel>], iteration_bounds = array<i64: 1>, scalar_prefetch = 0 : i64, scratch_operands = 0 : i64, tpu.core_type = #tpu.core_type<tc>, window_params = [{transform_indices = @transform_0, window_bounds = array<i64: 8, 128>}, {pipeline_mode = #tpu.pipeline_mode<synchronous>, transform_indices = @transform_1, window_bounds = array<i64: 128, 128>}, {pipeline_mode = #tpu.pipeline_mode<synchronous>, transform_indices = @transform_2, window_bounds = array<i64: 1, 128>}, {pipeline_mode = #tpu.pipeline_mode<synchronous>, transform_indices = @transform_3, window_bounds = array<i64: 128, 32>}, {pipeline_mode = #tpu.pipeline_mode<synchronous>, transform_indices = @transform_4, window_bounds = array<i64: 1, 32>}, {transform_indices = @transform_5, window_bounds = array<i64: 8, 32>}]} {
    %c0 = arith.constant 0 : index
    %c0_0 = arith.constant 0 : index
    %0 = vector.load %arg1[%c0, %c0_0] : memref<8x128xf32, #tpu.memory_space<vmem>>, vector<8x128xf32>
    %c0_1 = arith.constant 0 : index
    %c0_2 = arith.constant 0 : index
    %1 = vector.load %arg2[%c0_1, %c0_2] : memref<128x128xf32, #tpu.memory_space<vmem>>, vector<128x128xf32>
    %cst = arith.constant dense<0.000000e+00> : vector<8x128xf32>
    %2 = tpu.matmul %0, %1, %cst {dimension_numbers = #tpu.dot_dimension_numbers<[1], [0], [0], [1], [0, 0, 1, 1], [], []>} : vector<8x128xf32>, vector<128x128xf32>, vector<8x128xf32> -> vector<8x128xf32>
    %c0_3 = arith.constant 0 : index
    %c0_4 = arith.constant 0 : index
    %3 = vector.load %arg3[%c0_3, %c0_4] : memref<1x128xf32, #tpu.memory_space<vmem>>, vector<1x128xf32>
    %4 = vector.broadcast %3 : vector<1x128xf32> to vector<8x128xf32>
    %5 = arith.addf %2, %4 : vector<8x128xf32>
    %6 = math.tanh %5 : vector<8x128xf32>
    %c0_5 = arith.constant 0 : index
    %c0_6 = arith.constant 0 : index
    %7 = vector.load %arg4[%c0_5, %c0_6] : memref<128x32xf32, #tpu.memory_space<vmem>>, vector<128x32xf32>
    %cst_7 = arith.constant dense<0.000000e+00> : vector<8x32xf32>
    %8 = tpu.matmul %6, %7, %cst_7 {dimension_numbers = #tpu.dot_dimension_numbers<[1], [0], [0], [1], [0, 0, 1, 1], [], []>} : vector<8x128xf32>, vector<128x32xf32>, vector<8x32xf32> -> vector<8x32xf32>
    %c0_8 = arith.constant 0 : index
    %c0_9 = arith.constant 0 : index
    %9 = vector.load %arg5[%c0_8, %c0_9] : memref<1x32xf32, #tpu.memory_space<vmem>>, vector<1x32xf32>
    %10 = vector.broadcast %9 : vector<1x32xf32> to vector<8x32xf32>
    %11 = arith.addf %8, %10 : vector<8x32xf32>
    %12 = math.tanh %11 : vector<8x32xf32>
    %c0_10 = arith.constant 0 : index
    %c0_11 = arith.constant 0 : index
    %13 = vector.load %arg6[%c0_10, %c0_11] : memref<8x32xf32, #tpu.memory_space<vmem>>, vector<8x32xf32>
    tpu.vector_store %arg6[%c0_10, %c0_11], %12 {strides = array<i32>} : memref<8x32xf32, #tpu.memory_space<vmem>>, vector<8x32xf32>,
    return
  }
  func.func @transform_0(%arg0: i32) -> (i32, i32) {
    %c0_i32 = arith.constant 0 : i32
    %c0_i32_0 = arith.constant 0 : i32
    return %arg0, %c0_i32 : i32, i32
  }
  func.func @transform_1(%arg0: i32) -> (i32, i32) {
    %c0_i32 = arith.constant 0 : i32
    %c0_i32_0 = arith.constant 0 : i32
    %c0_i32_1 = arith.constant 0 : i32
    return %c0_i32, %c0_i32_0 : i32, i32
  }
  func.func @transform_2(%arg0: i32) -> (i32, i32) {
    %c0_i32 = arith.constant 0 : i32
    %c0_i32_0 = arith.constant 0 : i32
    %c0_i32_1 = arith.constant 0 : i32
    return %c0_i32, %c0_i32_0 : i32, i32
  }
  func.func @transform_3(%arg0: i32) -> (i32, i32) {
    %c0_i32 = arith.constant 0 : i32
    %c0_i32_0 = arith.constant 0 : i32
    %c0_i32_1 = arith.constant 0 : i32
    return %c0_i32, %c0_i32_0 : i32, i32
  }
  func.func @transform_4(%arg0: i32) -> (i32, i32) {
    %c0_i32 = arith.constant 0 : i32
    %c0_i32_0 = arith.constant 0 : i32
    %c0_i32_1 = arith.constant 0 : i32
    return %c0_i32, %c0_i32_0 : i32, i32
  }
  func.func @transform_5(%arg0: i32) -> (i32, i32) {
    %c0_i32 = arith.constant 0 : i32
    %c0_i32_0 = arith.constant 0 : i32
    return %arg0, %c0_i32 : i32, i32
  }
}

</mosaic_0001>

<llo_original>
// kernel: tpu_custom_call.1
$region0: #{tpu_custom_call.1}
  #allocation0 [shape = 'u32[]', space=smem, size = 0x4, offset = 0x4, fixed_abs, tag = 'smem constant byte address 0x4 - core index']
  #allocation1 [shape = 'u32[144,128]{1,0:T(1,128)}', space=vmem, size = 0x12000, scoped, tag = 'internal scratch']
  %s0 = inlined_call_operand.vmem [shape: f32[8,128], index: 0, kind: input, shape index: {}]
  %s1 = inlined_call_operand.vmem [shape: f32[128,128], index: 1, kind: input, shape index: {}]
  %s2 = inlined_call_operand.vmem [shape: f32[1,128], index: 2, kind: input, shape index: {}]
  %s3 = inlined_call_operand.vmem [shape: f32[128,32], index: 3, kind: input, shape index: {}]
  %s4 = inlined_call_operand.vmem [shape: f32[1,32], index: 4, kind: input, shape index: {}]
  %s5 = inlined_call_operand.hbm [shape: f32[8,32], index: 5, kind: output, shape index: {}]
  %s6 = sld [smem:[#allocation0]]
  $region30: #{tpu_custom_call.1} parent=0
    _
  %s8 = ssub.s32 1, %s6
  %s9 = scalar_select 0, %s8, %s6
  $region1: #{tpu_custom_call.1} parent=0
    #allocation2 [shape = 'u8[4096]{0}', space=vmem, size = 0x1000, scoped, tag = 'output window, operand 0, single buffered']
    #allocation3 [shape = 's32[1]{0}', space=sflag, size = 0x4, scoped, tag = 'scoped memory for tpu_custom_call.1']
    %10 = vsyncpa [#allocation3], 0
    // Predicated region
    $region2: #{tpu_custom_call.1} parent=1 // pred_check
      _
    $region3: #{tpu_custom_call.1} parent=1 // pred_check_branch
      %12 = sbr.rel (0) target = $region5
    $region4: #{tpu_custom_call.1} parent=1 // pred_region
      _
    $region5: #{tpu_custom_call.1} parent=1 // pred_fallthru
      _
    // Predicated region
    $region6: #{tpu_custom_call.1} parent=1 // pred_check
      _
    $region7: #{tpu_custom_call.1} parent=1 // pred_check_branch
      %14 = sbr.rel (0) target = $region9
    $region8: #{tpu_custom_call.1} parent=1 // pred_region
      _
    $region9: #{tpu_custom_call.1} parent=1 // pred_fallthru
      _
    // Predicated region
    $region10: #{tpu_custom_call.1} parent=1 // pred_check
      _
    $region11: #{tpu_custom_call.1} parent=1 // pred_check_branch
      %16 = sbr.rel (0) target = $region13
    $region12: #{tpu_custom_call.1} parent=1 // pred_region
      _
    $region13: #{tpu_custom_call.1} parent=1 // pred_fallthru
      _
    // Predicated region
    $region14: #{tpu_custom_call.1} parent=1 // pred_check
      _
    $region15: #{tpu_custom_call.1} parent=1 // pred_check_branch
      %18 = sbr.rel (0) target = $region17
    $region16: #{tpu_custom_call.1} parent=1 // pred_region
      _
    $region17: #{tpu_custom_call.1} parent=1 // pred_fallthru
      _
    // Predicated region
    $region18: #{tpu_custom_call.1} parent=1 // pred_check
      _
    $region19: #{tpu_custom_call.1} parent=1 // pred_check_branch
      %20 = sbr.rel (0) target = $region21
    $region20: #{tpu_custom_call.1} parent=1 // pred_region
      _
    $region21: #{tpu_custom_call.1} parent=1 // pred_fallthru
      _
    %v21 = vld [vmem:[%s0] sm:$0xff]
    %v22 = vld [vmem:[%s1] sm:$0xff]
    %v23 = vld [vmem:[%s1 + $0x8] sm:$0xff]
    %v24 = vld [vmem:[%s1 + $0x10] sm:$0xff]
    %v25 = vld [vmem:[%s1 + $0x18] sm:$0xff]
    %v26 = vld [vmem:[%s1 + $0x20] sm:$0xff]
    %v27 = vld [vmem:[%s1 + $0x28] sm:$0xff]
    %v28 = vld [vmem:[%s1 + $0x30] sm:$0xff]
    %v29 = vld [vmem:[%s1 + $0x38] sm:$0xff]
    %v30 = vld [vmem:[%s1 + $0x40] sm:$0xff]
    %v31 = vld [vmem:[%s1 + $0x48] sm:$0xff]
    %v32 = vld [vmem:[%s1 + $0x50] sm:$0xff]
    %v33 = vld [vmem:[%s1 + $0x58] sm:$0xff]
    %v34 = vld [vmem:[%s1 + $0x60] sm:$0xff]
    %v35 = vld [vmem:[%s1 + $0x68] sm:$0xff]
    %v36 = vld [vmem:[%s1 + $0x70] sm:$0xff]
    %v37 = vld [vmem:[%s1 + $0x78] sm:$0xff]
    %v38 = vld [vmem:[%s2] sm:$0x1]
    %v40 = vlaneseq
    %v41 = vshrl.u32 %v40, 7
    %v42 = vsub.s32 0, %v41
    %v43 = vrot.slane %v38, %v42
    %45 = vmatprep.subr.mxu0 0.0
    %46 = vmatpush1.msra.mxu0 %v37
    %47 = vmatprep.subr.mxu0 0.0
    %48 = vmatpush1.msra.mxu0 %v36
    %49 = vmatprep.subr.mxu0 0.0
    %50 = vmatpush1.msra.mxu0 %v35
    %51 = vmatprep.subr.mxu0 0.0
    %52 = vmatpush1.msra.mxu0 %v34
    %53 = vmatprep.subr.mxu0 0.0
    %54 = vmatpush1.msra.mxu0 %v33
    %55 = vmatprep.subr.mxu0 0.0
    %56 = vmatpush1.msra.mxu0 %v32
    %57 = vmatprep.subr.mxu0 0.0
    %58 = vmatpush1.msra.mxu0 %v31
    %59 = vmatprep.subr.mxu0 0.0
    %60 = vmatpush1.msra.mxu0 %v30
    %61 = vmatprep.subr.mxu0 0.0
    %62 = vmatpush1.msra.mxu0 %v29
    %63 = vmatprep.subr.mxu0 0.0
    %64 = vmatpush1.msra.mxu0 %v28
    %65 = vmatprep.subr.mxu0 0.0
    %66 = vmatpush1.msra.mxu0 %v27
    %67 = vmatprep.subr.mxu0 0.0
    %68 = vmatpush1.msra.mxu0 %v26
    %69 = vmatprep.subr.mxu0 0.0
    %70 = vmatpush1.msra.mxu0 %v25
    %71 = vmatprep.subr.mxu0 0.0
    %72 = vmatpush1.msra.mxu0 %v24
    %73 = vmatprep.subr.mxu0 0.0
    %74 = vmatpush1.msra.mxu0 %v23
    %75 = vmatprep.subr.mxu0 0.0
    %76 = vmatpush1.msra.mxu0 %v22
    %77 = vmatprep.subr.mxu0 0.0
    %78 = vmatpush2.msra.mxu0 0.0
    %79 = vmatprep.subr.mxu0 0.0
    %80 = vmatpush2.msra.mxu0 0.0
    %81 = vmatprep.subr.mxu0 0.0
    %82 = vmatpush2.msra.mxu0 0.0
    %83 = vmatprep.subr.mxu0 0.0
    %84 = vmatpush2.msra.mxu0 0.0
    %85 = vmatprep.subr.mxu0 0.0
    %86 = vmatpush2.msra.mxu0 0.0
    %87 = vmatprep.subr.mxu0 0.0
    %88 = vmatpush2.msra.mxu0 0.0
    %89 = vmatprep.subr.mxu0 0.0
    %90 = vmatpush2.msra.mxu0 0.0
    %91 = vmatprep.subr.mxu0 0.0
    %92 = vmatpush2.msra.mxu0 0.0
    %93 = vmatprep.subr.mxu0 0.0
    %94 = vmatpush2.msra.mxu0 0.0
    %95 = vmatprep.subr.mxu0 0.0
    %96 = vmatpush2.msra.mxu0 0.0
    %97 = vmatprep.subr.mxu0 0.0
    %98 = vmatpush2.msra.mxu0 0.0
    %99 = vmatprep.subr.mxu0 0.0
    %100 = vmatpush2.msra.mxu0 0.0
    %101 = vmatprep.subr.mxu0 0.0
    %102 = vmatpush2.msra.mxu0 0.0
    %103 = vmatprep.subr.mxu0 0.0
    %104 = vmatpush2.msra.mxu0 0.0
    %105 = vmatprep.subr.mxu0 0.0
    %106 = vmatpush2.msra.mxu0 0.0
    %107 = vmatprep.subr.mxu0 0.0
    %108 = vmatpush2.msra.mxu0 0.0
    %109 = vmatprep.mubr.f32.mxu0 0.0
    %110 = vmatmul.mubr.f32.gmra.mxu0 %v21
    %v111 = vpop.f32.mrf.mxu0
    %v112 = vadd.f32 %v43, %v111
    %v113 = vpop.f32.mrf.mxu0
    %114 = vdwg.mxu0
    %v115 = vtanh.pop %v112
    %v116 = vld [vmem:[%s3] sm:$0xff]
    %v117 = vld [vmem:[%s3 + $0x8] sm:$0xff]
    %v118 = vld [vmem:[%s3 + $0x10] sm:$0xff]
    %v119 = vld [vmem:[%s3 + $0x18] sm:$0xff]
    %v120 = vld [vmem:[%s3 + $0x20] sm:$0xff]
    %v121 = vld [vmem:[%s3 + $0x28] sm:$0xff]
    %v122 = vld [vmem:[%s3 + $0x30] sm:$0xff]
    %v123 = vld [vmem:[%s3 + $0x38] sm:$0xff]
    %v124 = vld [vmem:[%s3 + $0x40] sm:$0xff]
    %v125 = vld [vmem:[%s3 + $0x48] sm:$0xff]
    %v126 = vld [vmem:[%s3 + $0x50] sm:$0xff]
    %v127 = vld [vmem:[%s3 + $0x58] sm:$0xff]
    %v128 = vld [vmem:[%s3 + $0x60] sm:$0xff]
    %v129 = vld [vmem:[%s3 + $0x68] sm:$0xff]
    %v130 = vld [vmem:[%s3 + $0x70] sm:$0xff]
    %v131 = vld [vmem:[%s3 + $0x78] sm:$0xff]
    %v132 = vld [vmem:[%s4] sm:$0x1]
    %v134 = vlaneseq
    %v135 = vshrl.u32 %v134, 7
    %v136 = vsub.s32 0, %v135
    %v137 = vrot.slane %v132, %v136
    %139 = vmatprep.subr.mxu0 0.0
    %140 = vmatpush1.msra.mxu0 %v131
    %141 = vmatprep.subr.mxu0 0.0
    %142 = vmatpush1.msra.mxu0 %v130
    %143 = vmatprep.subr.mxu0 0.0
    %144 = vmatpush1.msra.mxu0 %v129
    %145 = vmatprep.subr.mxu0 0.0
    %146 = vmatpush1.msra.mxu0 %v128
    %147 = vmatprep.subr.mxu0 0.0
    %148 = vmatpush1.msra.mxu0 %v127
    %149 = vmatprep.subr.mxu0 0.0
    %150 = vmatpush1.msra.mxu0 %v126
    %151 = vmatprep.subr.mxu0 0.0
    %152 = vmatpush1.msra.mxu0 %v125
    %153 = vmatprep.subr.mxu0 0.0
    %154 = vmatpush1.msra.mxu0 %v124
    %155 = vmatprep.subr.mxu0 0.0
    %156 = vmatpush1.msra.mxu0 %v123
    %157 = vmatprep.subr.mxu0 0.0
    %158 = vmatpush1.msra.mxu0 %v122
    %159 = vmatprep.subr.mxu0 0.0
    %160 = vmatpush1.msra.mxu0 %v121
    %161 = vmatprep.subr.mxu0 0.0
    %162 = vmatpush1.msra.mxu0 %v120
    %163 = vmatprep.subr.mxu0 0.0
    %164 = vmatpush1.msra.mxu0 %v119
    %165 = vmatprep.subr.mxu0 0.0
    %166 = vmatpush1.msra.mxu0 %v118
    %167 = vmatprep.subr.mxu0 0.0
    %168 = vmatpush1.msra.mxu0 %v117
    %169 = vmatprep.subr.mxu0 0.0
    %170 = vmatpush1.msra.mxu0 %v116
    %171 = vmatprep.subr.mxu0 0.0
    %172 = vmatpush2.msra.mxu0 0.0
    %173 = vmatprep.subr.mxu0 0.0
    %174 = vmatpush2.msra.mxu0 0.0
    %175 = vmatprep.subr.mxu0 0.0
    %176 = vmatpush2.msra.mxu0 0.0
    %177 = vmatprep.subr.mxu0 0.0
    %178 = vmatpush2.msra.mxu0 0.0
    %179 = vmatprep.subr.mxu0 0.0
    %180 = vmatpush2.msra.mxu0 0.0
    %181 = vmatprep.subr.mxu0 0.0
    %182 = vmatpush2.msra.mxu0 0.0
    %183 = vmatprep.subr.mxu0 0.0
    %184 = vmatpush2.msra.mxu0 0.0
    %185 = vmatprep.subr.mxu0 0.0
    %186 = vmatpush2.msra.mxu0 0.0
    %187 = vmatprep.subr.mxu0 0.0
    %188 = vmatpush2.msra.mxu0 0.0
    %189 = vmatprep.subr.mxu0 0.0
    %190 = vmatpush2.msra.mxu0 0.0
    %191 = vmatprep.subr.mxu0 0.0
    %192 = vmatpush2.msra.mxu0 0.0
    %193 = vmatprep.subr.mxu0 0.0
    %194 = vmatpush2.msra.mxu0 0.0
    %195 = vmatprep.subr.mxu0 0.0
    %196 = vmatpush2.msra.mxu0 0.0
    %197 = vmatprep.subr.mxu0 0.0
    %198 = vmatpush2.msra.mxu0 0.0
    %199 = vmatprep.subr.mxu0 0.0
    %200 = vmatpush2.msra.mxu0 0.0
    %201 = vmatprep.subr.mxu0 0.0
    %202 = vmatpush2.msra.mxu0 0.0
    %203 = vmatprep.mubr.f32.mxu0 0.0
    %204 = vmatmul.mubr.f32.gmra.mxu0 %v115
    %v205 = vpop.f32.mrf.mxu0
    %v206 = vadd.f32 %v137, %v205
    %v207 = vpop.f32.mrf.mxu0
    %208 = vdwg.mxu0
    %v209 = vtanh.pop %v206
    %vm210 = vcmask 261120
    %211 = vst.msk [vmem:[#allocation2] sm:$0xff] %vm210, %v209
    // Predicated region
    $region22: #{tpu_custom_call.1} parent=1 // pred_check
      _
    $region23: #{tpu_custom_call.1} parent=1 // pred_check_branch
      %213 = sbr.rel (0) target = $region25
    $region24: #{tpu_custom_call.1} parent=1 // pred_region
      %s215 = ssub.s32 128, 128
      %216 = vsyncadd [#allocation3], %s215
      %s218 = sshll.u32 [#allocation2], 4
      %s219 = int_to_ptr.vmem [resolvable:$true] %s218
      %221 = dma.vmem_to_hbm [thread:$0]  %s219, 128, %s5, [#allocation3]
    $region25: #{tpu_custom_call.1} parent=1 // pred_fallthru
      _
    // Predicated region
    $region26: #{tpu_custom_call.1} parent=1 // pred_check
      _
    $region27: #{tpu_custom_call.1} parent=1 // pred_check_branch
      %223 = sbr.rel (0) target = $region29
    $region28: #{tpu_custom_call.1} parent=1 // pred_region
      %224 = dma.done [#allocation3], 128
    $region29: #{tpu_custom_call.1} parent=1 // pred_fallthru
      _
    %225 = vsyncpa [#allocation3], 1

</llo_original>
